<compile_context>
chip_gen: v6e
topology: v6e:2x2x1
jax: 0.10.0
libtpu: 0.0.40
codegen_flags: <defaults>
</compile_context>

<pallas_src>
import functools
import math

import jax
import jax.numpy as jnp
from jax.experimental import pallas as pl
from jax.experimental.pallas import tpu as pltpu

S_SCALE = 30.0
MARGIN = 0.5
GAMMA = 0.0
EPS_CLAMP = 1e-7
_COS_M = math.cos(MARGIN)
_SIN_M = math.sin(MARGIN)
_NEG = -1e9  # padding value for the class dim: exp(S*_NEG - max) == 0 exactly


def _round_up(x, m):
    return (x + m - 1) // m * m


def _arcface_ce_kernel(x_ref, lab_ref, loss_ref, m_scr, l_scr, t_scr, *, tc):
    k = pl.program_id(1)  # class-tile index (reduction axis, last)

    @pl.when(k == 0)
    def _init():
        m_scr[...] = jnp.full(m_scr.shape, -jnp.inf, dtype=jnp.float32)
        l_scr[...] = jnp.zeros(l_scr.shape, dtype=jnp.float32)
        t_scr[...] = jnp.zeros(t_scr.shape, dtype=jnp.float32)

    x = x_ref[...].astype(jnp.float32)          # (TB, TC)
    labels = lab_ref[...]                       # (TB, 1) int32

    col = jax.lax.broadcasted_iota(jnp.int32, x.shape, 1) + k * tc
    mask = col == labels                        # (TB, TC) — one-hot as a select mask

    # ArcFace margin applied per-row at the label column only:
    # cos(acos(xc) + m) = xc*cos(m) - sqrt(1 - xc^2)*sin(m) on the clamped domain.
    x_lab = jnp.sum(jnp.where(mask, x, 0.0), axis=-1, keepdims=True)   # (TB, 1)
    xc = jnp.clip(x_lab, -1.0 + EPS_CLAMP, 1.0 - EPS_CLAMP)
    sin_t = jnp.sqrt(jnp.maximum(1.0 - xc * xc, 0.0))
    tgt_logit = xc * _COS_M - sin_t * _SIN_M                            # (TB, 1)

    out = jnp.where(mask, tgt_logit, x) * S_SCALE                       # (TB, TC)

    # Scaled logit at the label position; exactly one class tile contributes per row.
    t_scr[...] += jnp.sum(jnp.where(mask, out, 0.0), axis=-1, keepdims=True)

    # Online logsumexp across class tiles (f32 accumulators).
    m_prev = m_scr[...]
    m_new = jnp.maximum(m_prev, jnp.max(out, axis=-1, keepdims=True))
    alpha = jnp.exp(m_prev - m_new)
    l_scr[...] = alpha * l_scr[...] + jnp.sum(jnp.exp(out - m_new), axis=-1,
                                              keepdims=True)
    m_scr[...] = m_new

    @pl.when(k == pl.num_programs(1) - 1)
    def _finalize():
        lse = m_scr[...] + jnp.log(l_scr[...])
        loss_ref[...] = lse - t_scr[...]        # per-sample CE, (TB, 1)


def arcface_loss(x, label, *, tb=256, tc=2048):
    """x: (B, C) cosine logits (f32 or bf16); label: (B,) int class indices."""
    B, C = x.shape
    TB = min(tb, _round_up(B, 8))
    TC = min(tc, _round_up(C, 128))
    Bp = _round_up(B, TB)
    Cp = _round_up(C, TC)

    label2d = label.astype(jnp.int32).reshape(B, 1)
    if Bp != B or Cp != C:
        x = jnp.pad(x, ((0, Bp - B), (0, Cp - C)), constant_values=_NEG)
    if Bp != B:
        label2d = jnp.pad(label2d, ((0, Bp - B), (0, 0)))

    grid = (Bp // TB, Cp // TC)
    kernel = functools.partial(_arcface_ce_kernel, tc=TC)

    per_sample = pl.pallas_call(
        kernel,
        out_shape=jax.ShapeDtypeStruct((Bp, 1), jnp.float32),
        grid_spec=pltpu.PrefetchScalarGridSpec(
            num_scalar_prefetch=0,
            grid=grid,
            in_specs=[
                pl.BlockSpec((TB, TC), lambda b, k: (b, k)),
                pl.BlockSpec((TB, 1), lambda b, k: (b, 0)),
            ],
            out_specs=pl.BlockSpec((TB, 1), lambda b, k: (b, 0)),
            scratch_shapes=[pltpu.VMEM((TB, 1), jnp.float32)] * 3,  # m, l, tgt
        ),
        compiler_params=pltpu.CompilerParams(
            dimension_semantics=("parallel", "arbitrary"),
            vmem_limit_bytes=32 * 1024 * 1024,
        ),
    )(x, label2d)

    # CrossEntropyLoss default reduction = mean over (valid) batch rows.
    logp = jnp.mean(per_sample[:B, 0])
    # FocalLoss(gamma=0): p = exp(-logp); loss = (1-p)^gamma * logp; .mean() no-op.
    p = jnp.exp(-logp)
    return (1.0 - p) ** GAMMA * logp


def _reference(x, label):
    # pure-JAX mirror of the PyTorch forward for correctness checking
    xc = jnp.clip(x, -1.0 + EPS_CLAMP, 1.0 - EPS_CLAMP)
    theta = jnp.arccos(xc)
    target_logits = jnp.cos(theta + MARGIN)
    one_hot = jax.nn.one_hot(label, x.shape[1], dtype=x.dtype)
    out = (x * (1.0 - one_hot) + target_logits * one_hot) * S_SCALE
    ce = jax.nn.logsumexp(out, axis=-1) - jnp.take_along_axis(
        out, label[:, None].astype(jnp.int32), axis=1)[:, 0]
    logp = jnp.mean(ce)
    p = jnp.exp(-logp)
    return (1.0 - p) ** GAMMA * logp


if __name__ == "__main__":
    key = jax.random.PRNGKey(0)
    k1, k2 = jax.random.split(key)
    B, C = 12, 320  # small, non-multiple shapes to exercise padding paths
    x = jnp.tanh(jax.random.normal(k1, (B, C), dtype=jnp.float32))
    label = jax.random.randint(k2, (B,), 0, C, dtype=jnp.int32)

    # multi-tile path: 2 batch tiles x 3 class tiles (online LSE + padding)
    loss_tiled = arcface_loss(x, label, tb=8, tc=128)
    # default-tile path: single block per axis
    loss_fused = arcface_loss(x, label)
    jax.block_until_ready((loss_tiled, loss_fused))

    ref = _reference(x, label)
    assert jnp.allclose(loss_tiled, ref, rtol=1e-5, atol=1e-4), (loss_tiled, ref)
    assert jnp.allclose(loss_fused, ref, rtol=1e-5, atol=1e-4), (loss_fused, ref)
    print("KERNEL_OK")
</pallas_src>

<mosaic_0001>
module attributes {stable_mosaic.version = 11 : i64} {
  func.func @_arcface_ce_kernel(%arg0: i32, %arg1: i32, %arg2: memref<8x128xf32, #tpu.memory_space<vmem>>, %arg3: memref<8x1xi32, #tpu.memory_space<vmem>>, %arg4: memref<8x1xf32, #tpu.memory_space<vmem>>, %arg5: memref<8x1xf32, #tpu.memory_space<vmem>>, %arg6: memref<8x1xf32, #tpu.memory_space<vmem>>, %arg7: memref<8x1xf32, #tpu.memory_space<vmem>>) attributes {dimension_semantics = [#tpu.dimension_semantics<parallel>, #tpu.dimension_semantics<arbitrary>], iteration_bounds = array<i64: 2, 3>, scalar_prefetch = 0 : i64, scratch_operands = 3 : i64, tpu.core_type = #tpu.core_type<tc>, window_params = [{transform_indices = @transform_0, window_bounds = array<i64: 8, 128>}, {transform_indices = @transform_1, window_bounds = array<i64: 8, 1>}, {transform_indices = @transform_2, window_bounds = array<i64: 8, 1>}]} {
    %c0_i32 = arith.constant 0 : i32
    %0 = arith.cmpi eq, %arg1, %c0_i32 : i32
    %1 = arith.extui %0 : i1 to i32
    %c0_i32_0 = arith.constant 0 : i32
    %2 = arith.cmpi ne, %1, %c0_i32_0 : i32
    scf.if %2 {
      %cst_29 = arith.constant 0xFF800000 : f32
      %61 = vector.broadcast %cst_29 : f32 to vector<8x1xf32>
      %c0_30 = arith.constant 0 : index
      %c0_31 = arith.constant 0 : index
      %62 = vector.load %arg5[%c0_30, %c0_31] : memref<8x1xf32, #tpu.memory_space<vmem>>, vector<8x1xf32>
      tpu.vector_store %arg5[%c0_30, %c0_31], %61 {strides = array<i32>} : memref<8x1xf32, #tpu.memory_space<vmem>>, vector<8x1xf32>,
      %cst_32 = arith.constant 0.000000e+00 : f32
      %63 = vector.broadcast %cst_32 : f32 to vector<8x1xf32>
      %c0_33 = arith.constant 0 : index
      %c0_34 = arith.constant 0 : index
      %64 = vector.load %arg6[%c0_33, %c0_34] : memref<8x1xf32, #tpu.memory_space<vmem>>, vector<8x1xf32>
      tpu.vector_store %arg6[%c0_33, %c0_34], %63 {strides = array<i32>} : memref<8x1xf32, #tpu.memory_space<vmem>>, vector<8x1xf32>,
      %cst_35 = arith.constant 0.000000e+00 : f32
      %65 = vector.broadcast %cst_35 : f32 to vector<8x1xf32>
      %c0_36 = arith.constant 0 : index
      %c0_37 = arith.constant 0 : index
      %66 = vector.load %arg7[%c0_36, %c0_37] : memref<8x1xf32, #tpu.memory_space<vmem>>, vector<8x1xf32>
      tpu.vector_store %arg7[%c0_36, %c0_37], %65 {strides = array<i32>} : memref<8x1xf32, #tpu.memory_space<vmem>>, vector<8x1xf32>,
    } else {
    }
    %c0 = arith.constant 0 : index
    %c0_1 = arith.constant 0 : index
    %3 = vector.load %arg2[%c0, %c0_1] : memref<8x128xf32, #tpu.memory_space<vmem>>, vector<8x128xf32>
    %c0_2 = arith.constant 0 : index
    %c0_3 = arith.constant 0 : index
    %4 = vector.load %arg3[%c0_2, %c0_3] : memref<8x1xi32, #tpu.memory_space<vmem>>, vector<8x1xi32>
    %5 = tpu.iota {dimensions = array<i32: 1>} : vector<8x128xi32>
    %c128_i32 = arith.constant 128 : i32
    %6 = arith.muli %arg1, %c128_i32 : i32
    %7 = vector.broadcast %6 : i32 to vector<8x128xi32>
    %8 = arith.addi %5, %7 : vector<8x128xi32>
    %9 = vector.broadcast %4 : vector<8x1xi32> to vector<8x128xi32>
    %10 = arith.cmpi eq, %8, %9 : vector<8x128xi32>
    %cst = arith.constant 0.000000e+00 : f32
    %11 = vector.broadcast %cst : f32 to vector<8x128xf32>
    %12 = arith.select %10, %3, %11 : vector<8x128xi1>, vector<8x128xf32>
    %cst_4 = arith.constant dense<0.000000e+00> : vector<8xf32>
    %13 = vector.multi_reduction <add>, %12, %cst_4 [1] : vector<8x128xf32> to vector<8xf32>
    %14 = vector.shape_cast %13 : vector<8xf32> to vector<8x1xf32>
    %cst_5 = arith.constant -0.99999988 : f32
    %cst_6 = arith.constant 0.99999988 : f32
    %15 = vector.broadcast %cst_5 : f32 to vector<8x1xf32>
    %16 = arith.maximumf %15, %14 : vector<8x1xf32>
    %17 = vector.broadcast %cst_6 : f32 to vector<8x1xf32>
    %18 = arith.minimumf %17, %16 : vector<8x1xf32>
    %19 = arith.mulf %18, %18 : vector<8x1xf32>
    %cst_7 = arith.constant 1.000000e+00 : f32
    %20 = vector.broadcast %cst_7 : f32 to vector<8x1xf32>
    %21 = arith.subf %20, %19 : vector<8x1xf32>
    %cst_8 = arith.constant 0.000000e+00 : f32
    %22 = vector.broadcast %cst_8 : f32 to vector<8x1xf32>
    %23 = arith.maximumf %21, %22 : vector<8x1xf32>
    %24 = math.sqrt %23 : vector<8x1xf32>
    %cst_9 = arith.constant 0.87758255 : f32
    %25 = vector.broadcast %cst_9 : f32 to vector<8x1xf32>
    %26 = arith.mulf %18, %25 : vector<8x1xf32>
    %cst_10 = arith.constant 0.47942555 : f32
    %27 = vector.broadcast %cst_10 : f32 to vector<8x1xf32>
    %28 = arith.mulf %24, %27 : vector<8x1xf32>
    %29 = arith.subf %26, %28 : vector<8x1xf32>
    %30 = vector.shape_cast %29 : vector<8x1xf32> to vector<8x1xf32>
    %31 = vector.broadcast %30 : vector<8x1xf32> to vector<8x128xf32>
    %32 = arith.select %10, %31, %3 : vector<8x128xi1>, vector<8x128xf32>
    %cst_11 = arith.constant 3.000000e+01 : f32
    %33 = vector.broadcast %cst_11 : f32 to vector<8x128xf32>
    %34 = arith.mulf %32, %33 : vector<8x128xf32>
    %c0_12 = arith.constant 0 : index
    %c0_13 = arith.constant 0 : index
    %35 = vector.load %arg7[%c0_12, %c0_13] : memref<8x1xf32, #tpu.memory_space<vmem>>, vector<8x1xf32>
    %cst_14 = arith.constant 0.000000e+00 : f32
    %36 = vector.broadcast %cst_14 : f32 to vector<8x128xf32>
    %37 = arith.select %10, %34, %36 : vector<8x128xi1>, vector<8x128xf32>
    %cst_15 = arith.constant dense<0.000000e+00> : vector<8xf32>
    %38 = vector.multi_reduction <add>, %37, %cst_15 [1] : vector<8x128xf32> to vector<8xf32>
    %39 = vector.shape_cast %38 : vector<8xf32> to vector<8x1xf32>
    %40 = arith.addf %35, %39 : vector<8x1xf32>
    %c0_16 = arith.constant 0 : index
    %c0_17 = arith.constant 0 : index
    %41 = vector.load %arg7[%c0_16, %c0_17] : memref<8x1xf32, #tpu.memory_space<vmem>>, vector<8x1xf32>
    tpu.vector_store %arg7[%c0_16, %c0_17], %40 {strides = array<i32>} : memref<8x1xf32, #tpu.memory_space<vmem>>, vector<8x1xf32>,
    %c0_18 = arith.constant 0 : index
    %c0_19 = arith.constant 0 : index
    %42 = vector.load %arg5[%c0_18, %c0_19] : memref<8x1xf32, #tpu.memory_space<vmem>>, vector<8x1xf32>
    %cst_20 = arith.constant dense<0xFF800000> : vector<8xf32>
    %43 = vector.multi_reduction <maximumf>, %34, %cst_20 [1] : vector<8x128xf32> to vector<8xf32>
    %44 = vector.shape_cast %43 : vector<8xf32> to vector<8x1xf32>
    %45 = arith.maximumf %42, %44 : vector<8x1xf32>
    %46 = arith.subf %42, %45 : vector<8x1xf32>
    %47 = math.exp %46 : vector<8x1xf32>
    %c0_21 = arith.constant 0 : index
    %c0_22 = arith.constant 0 : index
    %48 = vector.load %arg6[%c0_21, %c0_22] : memref<8x1xf32, #tpu.memory_space<vmem>>, vector<8x1xf32>
    %49 = arith.mulf %47, %48 : vector<8x1xf32>
    %50 = vector.broadcast %45 : vector<8x1xf32> to vector<8x128xf32>
    %51 = arith.subf %34, %50 : vector<8x128xf32>
    %52 = math.exp %51 : vector<8x128xf32>
    %cst_23 = arith.constant dense<0.000000e+00> : vector<8xf32>
    %53 = vector.multi_reduction <add>, %52, %cst_23 [1] : vector<8x128xf32> to vector<8xf32>
    %54 = vector.shape_cast %53 : vector<8xf32> to vector<8x1xf32>
    %55 = arith.addf %49, %54 : vector<8x1xf32>
    %c0_24 = arith.constant 0 : index
    %c0_25 = arith.constant 0 : index
    %56 = vector.load %arg6[%c0_24, %c0_25] : memref<8x1xf32, #tpu.memory_space<vmem>>, vector<8x1xf32>
    tpu.vector_store %arg6[%c0_24, %c0_25], %55 {strides = array<i32>} : memref<8x1xf32, #tpu.memory_space<vmem>>, vector<8x1xf32>,
    %c0_26 = arith.constant 0 : index
    %c0_27 = arith.constant 0 : index
    %57 = vector.load %arg5[%c0_26, %c0_27] : memref<8x1xf32, #tpu.memory_space<vmem>>, vector<8x1xf32>
    tpu.vector_store %arg5[%c0_26, %c0_27], %45 {strides = array<i32>} : memref<8x1xf32, #tpu.memory_space<vmem>>, vector<8x1xf32>,
    %c2_i32 = arith.constant 2 : i32
    %58 = arith.cmpi eq, %arg1, %c2_i32 : i32
    %59 = arith.extui %58 : i1 to i32
    %c0_i32_28 = arith.constant 0 : i32
    %60 = arith.cmpi ne, %59, %c0_i32_28 : i32
    scf.if %60 {
      %c0_29 = arith.constant 0 : index
      %c0_30 = arith.constant 0 : index
      %61 = vector.load %arg5[%c0_29, %c0_30] : memref<8x1xf32, #tpu.memory_space<vmem>>, vector<8x1xf32>
      %c0_31 = arith.constant 0 : index
      %c0_32 = arith.constant 0 : index
      %62 = vector.load %arg6[%c0_31, %c0_32] : memref<8x1xf32, #tpu.memory_space<vmem>>, vector<8x1xf32>
      %63 = math.log %62 : vector<8x1xf32>
      %64 = arith.addf %61, %63 : vector<8x1xf32>
      %c0_33 = arith.constant 0 : index
      %c0_34 = arith.constant 0 : index
      %65 = vector.load %arg7[%c0_33, %c0_34] : memref<8x1xf32, #tpu.memory_space<vmem>>, vector<8x1xf32>
      %66 = arith.subf %64, %65 : vector<8x1xf32>
      %c0_35 = arith.constant 0 : index
      %c0_36 = arith.constant 0 : index
      %67 = vector.load %arg4[%c0_35, %c0_36] : memref<8x1xf32, #tpu.memory_space<vmem>>, vector<8x1xf32>
      tpu.vector_store %arg4[%c0_35, %c0_36], %66 {strides = array<i32>} : memref<8x1xf32, #tpu.memory_space<vmem>>, vector<8x1xf32>,
    } else {
    }
    return
  }
  func.func @transform_0(%arg0: i32, %arg1: i32) -> (i32, i32) {
    %c0_i32 = arith.constant 0 : i32
    return %arg0, %arg1 : i32, i32
  }
  func.func @transform_1(%arg0: i32, %arg1: i32) -> (i32, i32) {
    %c0_i32 = arith.constant 0 : i32
    %c0_i32_0 = arith.constant 0 : i32
    return %arg0, %c0_i32 : i32, i32
  }
  func.func @transform_2(%arg0: i32, %arg1: i32) -> (i32, i32) {
    %c0_i32 = arith.constant 0 : i32
    %c0_i32_0 = arith.constant 0 : i32
    return %arg0, %c0_i32 : i32, i32
  }
}

</mosaic_0001>

<llo_original>
// kernel: tpu_custom_call.1
$region0: #{tpu_custom_call.1}
  #allocation0 [shape = 'u32[]', space=smem, size = 0x4, offset = 0x4, fixed_abs, tag = 'smem constant byte address 0x4 - core index']
  #allocation1 [shape = 'u32[144,128]{1,0:T(1,128)}', space=vmem, size = 0x12000, scoped, tag = 'internal scratch']
  #allocation2 [shape = 'f32[8,1]{1,0:T(8,128)}', space=vmem, size = 0x1000, scoped, tag = 'scratch operand']
  #allocation3 [shape = 'f32[8,1]{1,0:T(8,128)}', space=vmem, size = 0x1000, scoped, tag = 'scratch operand']
  #allocation4 [shape = 'f32[8,1]{1,0:T(8,128)}', space=vmem, size = 0x1000, scoped, tag = 'scratch operand']
  %s0 = inlined_call_operand.hbm [shape: f32[16,384], index: 0, kind: input, shape index: {}]
  %s1 = inlined_call_operand.vmem [shape: s32[16,1], index: 1, kind: input, shape index: {}]
  %s2 = inlined_call_operand.vmem [shape: f32[16,1], index: 2, kind: output, shape index: {}]
  %s3 = sld [smem:[#allocation0]]
  $region53: #{tpu_custom_call.1} parent=0
    _
  %s5 = ssub.s32 1, %s3
  %s6 = scalar_select 0, %s5, %s3
  $region1: #{tpu_custom_call.1} parent=0
    #allocation5 [shape = 'u8[8192]{0}', space=vmem, size = 0x2000, scoped, tag = 'input window, operand 0']
    #allocation6 [shape = 's32[2]{0}', space=sflag, size = 0x8, scoped, tag = 'scoped memory for tpu_custom_call.1']
    %7 = vsyncpa [#allocation6], 0
    %s8 = scalar_lea.sflag [#allocation6], 1
    %9 = vsyncpa %s8, 0
    loop: start=0, step=1, limit=8
    $region2: #{tpu_custom_call.1} parent=1 // loop_pre_header
      _
    $region3: #{tpu_custom_call.1} parent=1 // loop_header
      %s11 = sphi 0, %s15
      %p12 = scmp.ge.s32.totalorder %s11, 8
      %s18 = sphi 0, %s30
      %s19 = sphi 0, %s26
      %s20 = sphi 0, %s18
      %s21 = sphi 0, %s19
      %s22 = sphi 0, %s20
      %s23 = sphi 0, %s21
      %s35 = sphi 0, %s37
      %s38 = sphi 0, %s35
      %s39 = sphi 0, %s38
      %s55 = sphi 0, %s39
      %s61 = sphi 0, %s63
      %s64 = sphi 0, %s61
      %s65 = sphi 0, %s64
      %s81 = sphi 0, %s65
      %s87 = sphi 0, %s89
      %s90 = sphi 0, %s87
      %s91 = sphi 0, %s90
      %s107 = sphi 0, %s91
    $region4: #{tpu_custom_call.1} parent=1 // loop_header_branch
      %14 = sbr.rel (%p12) target = $region8
    $region5: #{tpu_custom_call.1} parent=1 // loop_body
      %s16 = ssub.s32 %s11, 1
      %s17 = ssub.s32 %s11, 2
      %s24 = sadd.s32 1, %s19
      %p25 = scmp.ge.s32.totalorder %s24, 3
      %s26 = scalar_select %p25, 0, %s24
      %s27 = sadd.s32 1, %s18
      %s28 = scalar_select %p25, %s27, %s18
      %p29 = scmp.ge.s32.totalorder %s28, 2
      %s30 = scalar_select %p29, 0, %s28
      %s31 = ssub.s32 %s18, %s30
      %s32 = ssub.s32 %s19, %s26
      %s33 = sor.u32 %s31, %s32
      %p34 = scmp.eq.s32.totalorder %s33, 0
      %s36 = sadd.s32 %s35, 1
      %s37 = scalar_select %p34, %s35, %s36
      %p40 = pneg %p34
      %p41 = scmp.eq.s32.totalorder %s11, 5
      %p42 = por %p40, %p41
      %p43 = scmp.ne.s32.totalorder %s35, %s38
      %p44 = scmp.eq.s32.totalorder %s11, 0
      %p45 = por %p43, %p44
      %p46 = scmp.ne.s32.totalorder %s35, %s38
      %p47 = scmp.eq.s32.totalorder %s16, 5
      %p48 = por %p46, %p47
      %p49 = scmp.ne.s32.totalorder %s38, %s39
      %p50 = scmp.eq.s32.totalorder %s16, 0
      %p51 = por %p49, %p50
      %p52 = scmp.ne.s32.totalorder %s38, %s39
      %p53 = scmp.eq.s32.totalorder %s17, 5
      %p54 = por %p52, %p53
      %p56 = scmp.ne.s32.totalorder %s39, %s55
      %p57 = scmp.eq.s32.totalorder %s17, 0
      %p58 = por %p56, %p57
      %s59 = ssub.s32 %s18, %s30
      %p60 = scmp.eq.s32.totalorder %s59, 0
      %s62 = sadd.s32 %s61, 1
      %s63 = scalar_select %p60, %s61, %s62
      %p66 = pneg %p60
      %p67 = scmp.eq.s32.totalorder %s11, 5
      %p68 = por %p66, %p67
      %p69 = scmp.ne.s32.totalorder %s61, %s64
      %p70 = scmp.eq.s32.totalorder %s11, 0
      %p71 = por %p69, %p70
      %p72 = scmp.ne.s32.totalorder %s61, %s64
      %p73 = scmp.eq.s32.totalorder %s16, 5
      %p74 = por %p72, %p73
      %p75 = scmp.ne.s32.totalorder %s64, %s65
      %p76 = scmp.eq.s32.totalorder %s16, 0
      %p77 = por %p75, %p76
      %p78 = scmp.ne.s32.totalorder %s64, %s65
      %p79 = scmp.eq.s32.totalorder %s17, 5
      %p80 = por %p78, %p79
      %p82 = scmp.ne.s32.totalorder %s65, %s81
      %p83 = scmp.eq.s32.totalorder %s17, 0
      %p84 = por %p82, %p83
      %s85 = ssub.s32 %s18, %s30
      %p86 = scmp.eq.s32.totalorder %s85, 0
      %s88 = sadd.s32 %s87, 1
      %s89 = scalar_select %p86, %s87, %s88
      %p92 = pneg %p86
      %p93 = scmp.eq.s32.totalorder %s11, 5
      %p94 = por %p92, %p93
      %p95 = scmp.ne.s32.totalorder %s87, %s90
      %p96 = scmp.eq.s32.totalorder %s11, 0
      %p97 = por %p95, %p96
      %p98 = scmp.ne.s32.totalorder %s87, %s90
      %p99 = scmp.eq.s32.totalorder %s16, 5
      %p100 = por %p98, %p99
      %p101 = scmp.ne.s32.totalorder %s90, %s91
      %p102 = scmp.eq.s32.totalorder %s16, 0
      %p103 = por %p101, %p102
      %p104 = scmp.ne.s32.totalorder %s90, %s91
      %p105 = scmp.eq.s32.totalorder %s17, 5
      %p106 = por %p104, %p105
      %p108 = scmp.ne.s32.totalorder %s91, %s107
      %p109 = scmp.eq.s32.totalorder %s17, 0
      %p110 = por %p108, %p109
      %p111 = scmp.le.s32.totalorder 1, %s11
      %p112 = scmp.lt.s32.totalorder %s11, 7
      %p113 = pnand %p111, %p112
      %p114 = pneg %p113
      // Predicated region
      $region9: #{tpu_custom_call.1} parent=5 // pred_check
        _
      $region10: #{tpu_custom_call.1} parent=5 // pred_check_branch
        %116 = sbr.rel (%p113) target = $region12
      $region11: #{tpu_custom_call.1} parent=5 // pred_region
        %s117 = ssub.s32 %s11, 1
      $region12: #{tpu_custom_call.1} parent=5 // pred_fallthru
        _
      %p118 = scmp.lt.s32.totalorder %s11, 6
      // Predicated region
      $region13: #{tpu_custom_call.1} parent=5 // pred_check
        %p119 = pneg %p118
      $region14: #{tpu_custom_call.1} parent=5 // pred_check_branch
        %121 = sbr.rel (%p119) target = $region16
      $region15: #{tpu_custom_call.1} parent=5 // pred_region
        // Predicated region
        $region17: #{tpu_custom_call.1} parent=15 // pred_check
          %p122 = pneg %p45
        $region18: #{tpu_custom_call.1} parent=15 // pred_check_branch
          %124 = sbr.rel (%p122) target = $region20
        $region19: #{tpu_custom_call.1} parent=15 // pred_region
          %s125 = sand.u32 %s35, 1
          %s126 = scalar_lea.sflag [#allocation6], %s125
          %s127 = sand.u32 %s35, 1
          %s128 = smul.addr %s127, 8
          %s129 = scalar_lea.vmem [#allocation5], %s128
          %s131 = ssub.s32 128, 128
          %132 = vsyncadd %s126, %s131
          %s133 = smul.addr %s18, 3
          %s134 = sadd.s32 %s19, %s133
          %s135 = smul.addr %s134, 128
          %s136 = scalar_lea.hbm %s0, %s135
          %s138 = sshll.u32 %s129, 4
          %s139 = int_to_ptr.vmem [resolvable:$true] %s138
          %141 = dma.hbm_to_vmem [thread:$0]  %s136, 128, %s139, %s126
        $region20: #{tpu_custom_call.1} parent=15 // pred_fallthru
          _
        // Predicated region
        $region21: #{tpu_custom_call.1} parent=15 // pred_check
          %p142 = pneg %p71
        $region22: #{tpu_custom_call.1} parent=15 // pred_check_branch
          %144 = sbr.rel (%p142) target = $region24
        $region23: #{tpu_custom_call.1} parent=15 // pred_region
          %p145 = scmp.lt.s32.totalorder %s18, 1
          %s146 = scalar_select %p145, %s18, 1
          %s147 = smul.addr %s146, 8
          %s148 = scalar_lea.vmem %s1, %s147
        $region24: #{tpu_custom_call.1} parent=15 // pred_fallthru
          _
      $region16: #{tpu_custom_call.1} parent=5 // pred_fallthru
        _
      %p149 = scmp.le.s32.totalorder 1, %s11
      %p150 = scmp.lt.s32.totalorder %s11, 7
      %p151 = pnand %p149, %p150
      %p152 = pneg %p151
      // Predicated region
      $region25: #{tpu_custom_call.1} parent=5 // pred_check
        _
      $region26: #{tpu_custom_call.1} parent=5 // pred_check_branch
        %154 = sbr.rel (%p151) target = $region28
      $region27: #{tpu_custom_call.1} parent=5 // pred_region
        %s155 = ssub.s32 %s11, 1
        %s156 = sand.u32 %s38, 1
        %s157 = scalar_lea.sflag [#allocation6], %s156
        %s158 = sand.u32 %s38, 1
        %s159 = smul.addr %s158, 8
        %s160 = scalar_lea.vmem [#allocation5], %s159
        // Predicated region
        $region29: #{tpu_custom_call.1} parent=27 // pred_check
          %p161 = pneg %p51
        $region30: #{tpu_custom_call.1} parent=27 // pred_check_branch
          %163 = sbr.rel (%p161) target = $region32
        $region31: #{tpu_custom_call.1} parent=27 // pred_region
          %164 = dma.done %s157, 128
        $region32: #{tpu_custom_call.1} parent=27 // pred_fallthru
          _
        %s165 = sand.u32 %s38, 1
        %s166 = scalar_lea.sflag [#allocation6], %s165
        %s167 = sand.u32 %s38, 1
        %s168 = smul.addr %s167, 8
        %s169 = scalar_lea.vmem [#allocation5], %s168
        %p170 = pneg %p51
        %p171 = pneg %p48
        %p172 = scmp.lt.s32.totalorder %s20, 1
        %s173 = scalar_select %p172, %s20, 1
        %s174 = smul.addr %s173, 8
        %s175 = scalar_lea.vmem %s1, %s174
        %p176 = pneg %p77
        %p177 = pneg %p74
        %p178 = pneg %p103
        %p179 = pneg %p100
        %p180 = scmp.lt.s32.totalorder %s20, 1
        %s181 = scalar_select %p180, %s20, 1
        %s182 = smul.addr %s181, 8
        %s183 = scalar_lea.vmem %s2, %s182
        %p184 = scmp.lt.s32.totalorder %s20, 1
        %s185 = scalar_select %p184, %s20, 1
        %s186 = smul.addr %s185, 8
        %s187 = scalar_lea.vmem %s1, %s186
        %p188 = scmp.lt.s32.totalorder %s20, 1
        %s189 = scalar_select %p188, %s20, 1
        %s190 = smul.addr %s189, 8
        %s191 = scalar_lea.vmem %s2, %s190
        %p192 = scmp.eq.s32.totalorder %s21, 0
        // Predicated region
        $region33: #{tpu_custom_call.1} parent=27 // pred_check
          %p193 = pneg %p192
        $region34: #{tpu_custom_call.1} parent=27 // pred_check_branch
          %195 = sbr.rel (%p193) target = $region36
        $region35: #{tpu_custom_call.1} parent=27 // pred_region
          %vm196 = vcmask 7168
          %197 = vst.msk [vmem:[#allocation2] sm:$0xff] %vm196, -inf
          %198 = vst.msk [vmem:[#allocation3] sm:$0xff] %vm196, 0.0
          %199 = vst.msk [vmem:[#allocation4] sm:$0xff] %vm196, 0.0
        $region36: #{tpu_custom_call.1} parent=27 // pred_fallthru
          _
        %v200 = vld [vmem:[%s160] sm:$0xff]
        %v201 = vld [vmem:[%s187] sm:$0xff]
        %v202 = vlaneseq
        %v203 = vand.u32 %v202, 127
        %s204 = smul.u32 %s21, 128
        %v205 = vstv %s204
        %v206 = vadd.s32 %v203, %v205
        %207 = vset.pattern.permute.xlu0 0
        %208 = vperm.xlu0 %207, %v201
        %v209 = vpop.permute.xlu0 %208
        %vm210 = vcmp.eq.s32.totalorder %v206, %v209
        %v211 = vsel %vm210, %v200, 0.0
        %212 = vadd.xlane.f32.xlu0 %v211
        %v213 = vpop.xlane.xlu0 %212
        %v214 = vmax.f32 %v213, -0.9999999
        %v215 = vmin.f32 %v214, 0.9999999
        %v216 = vmul.f32 %v215, %v215
        %v217 = vsub.f32 1.0, %v216
        %v218 = vmax.f32 %v217, 0.0
        %v219 = vrsqrt.pop %v218
        %v220 = vmul.f32 %v218, %v219
        %vm221 = vcmp.eq.f32.partialorder %v218, inf
        %v222 = vsel %vm221, %v218, %v220
        %vm223 = vcmp.eq.f32.partialorder %v218, 0.0
        %v224 = vand.u32 %v218, 2147483648
        %v225 = vsel %vm223, %v224, %v222
        %v226 = vmul.f32 %v215, 0.87758255
        %v227 = vmul.f32 %v225, 0.47942555
        %v228 = vsub.f32 %v226, %v227
        %v229 = vsel %vm210, %v228, %v200
        %v230 = vmul.f32 %v229, 30.0
        %v231 = vld [vmem:[#allocation4] sm:$0xff]
        %v232 = vsel %vm210, %v230, 0.0
        %233 = vadd.xlane.f32.xlu0 %v232
        %v234 = vpop.xlane.xlu0 %233
        %v235 = vadd.f32 %v231, %v234
        %vm236 = vcmask 7168
        %237 = vst.msk [vmem:[#allocation4] sm:$0xff] %vm236, %v235
        %v238 = vld [vmem:[#allocation2] sm:$0xff]
        %239 = vmax.xlane.f32.xlu0 %v230
        %v240 = vpop.xlane.xlu0 %239
        %v241 = vmax.f32 %v238, %v240
        %v242 = vsub.f32 %v238, %v241
        %v243 = vmul.f32 %v242, 1.442695
        %v244 = vpow.pop %v243
        %v245 = vld [vmem:[#allocation3] sm:$0xff]
        %v246 = vmul.f32 %v244, %v245
        %248 = vset.pattern.permute.xlu0 0
        %249 = vperm.xlu0 %248, %v241
        %v250 = vpop.permute.xlu0 %249
        %v252 = vsub.f32 %v230, %v250
        %v253 = vmul.f32 %v252, 1.442695
        %v254 = vpow.pop %v253
        %255 = vadd.xlane.f32.xlu0 %v254
        %v256 = vpop.xlane.xlu0 %255
        %v257 = vadd.f32 %v246, %v256
        %258 = vst.msk [vmem:[#allocation3] sm:$0xff] %vm236, %v257
        %259 = vst.msk [vmem:[#allocation2] sm:$0xff] %vm236, %v241
        %p260 = scmp.eq.s32.totalorder %s21, 2
        // Predicated region
        $region37: #{tpu_custom_call.1} parent=27 // pred_check
          %p261 = pneg %p260
        $region38: #{tpu_custom_call.1} parent=27 // pred_check_branch
          %263 = sbr.rel (%p261) target = $region40
        $region39: #{tpu_custom_call.1} parent=27 // pred_region
          %v264 = vld [vmem:[#allocation2] sm:$0xff]
          %v265 = vld [vmem:[#allocation3] sm:$0xff]
          %v266 = vlog2.pop %v265
          %v267 = vmul.f32 %v266, 0.6931472
          %v268 = vadd.f32 %v264, %v267
          %v269 = vld [vmem:[#allocation4] sm:$0xff]
          %v270 = vsub.f32 %v268, %v269
          %271 = vst.msk [vmem:[%s191] sm:$0xff] %vm236, %v270
        $region40: #{tpu_custom_call.1} parent=27 // pred_fallthru
          _
        %p272 = scmp.lt.s32.totalorder %s20, 1
        %s273 = scalar_select %p272, %s20, 1
        %s274 = smul.addr %s273, 8
        %s275 = scalar_lea.vmem %s2, %s274
        // Predicated region
        $region41: #{tpu_custom_call.1} parent=27 // pred_check
          %p276 = pneg %p100
        $region42: #{tpu_custom_call.1} parent=27 // pred_check_branch
          %278 = sbr.rel (%p276) target = $region44
        $region43: #{tpu_custom_call.1} parent=27 // pred_region
          _
        $region44: #{tpu_custom_call.1} parent=27 // pred_fallthru
          _
      $region28: #{tpu_custom_call.1} parent=5 // pred_fallthru
        _
      %p279 = scmp.le.s32.totalorder 2, %s11
      // Predicated region
      $region45: #{tpu_custom_call.1} parent=5 // pred_check
        %p280 = pneg %p279
      $region46: #{tpu_custom_call.1} parent=5 // pred_check_branch
        %282 = sbr.rel (%p280) target = $region48
      $region47: #{tpu_custom_call.1} parent=5 // pred_region
        %s283 = ssub.s32 %s11, 2
        // Predicated region
        $region49: #{tpu_custom_call.1} parent=47 // pred_check
          %p284 = pneg %p106
        $region50: #{tpu_custom_call.1} parent=47 // pred_check_branch
          %286 = sbr.rel (%p284) target = $region52
        $region51: #{tpu_custom_call.1} parent=47 // pred_region
          %p287 = scmp.lt.s32.totalorder %s22, 1
          %s288 = scalar_select %p287, %s22, 1
          %s289 = smul.addr %s288, 8
          %s290 = scalar_lea.vmem %s2, %s289
        $region52: #{tpu_custom_call.1} parent=47 // pred_fallthru
          _
      $region48: #{tpu_custom_call.1} parent=5 // pred_fallthru
        _
    $region6: #{tpu_custom_call.1} parent=1 // loop_footer
      %s15 = sadd.s32 1, %s11
    $region7: #{tpu_custom_call.1} parent=1 // loop_footer_branch
      %10 = sbr.rel target = $region3
    $region8: #{tpu_custom_call.1} parent=1 // loop_exit
      _
    %291 = vsyncpa [#allocation6], 1
    %s292 = scalar_lea.sflag [#allocation6], 1
    %293 = vsyncpa %s292, 1

</llo_original>
